<compile_context>
chip_gen: v5e
topology: v5e:2x2
jax: 0.10.0
libtpu: 0.0.40
codegen_flags: <defaults>
</compile_context>

<pallas_src>
import jax
import jax.numpy as jnp
import numpy as np
from jax.experimental import pallas as pl
from jax.experimental.pallas import tpu as pltpu

BN_EPS = 1e-5


def _round_up(x, m):
    return (x + m - 1) // m * m


def default_classifier_forward(feat, offset, params, num_classes, *,
                               tile_n=None, n_splits=2,
                               compute_dtype=jnp.bfloat16):
    """feat: (N_total, D); offset: (B,) int32 cumulative point counts."""
    n_total, d = feat.shape
    batch = int(offset.shape[0])
    b_pad = max(8, _round_up(batch, 8))             # sublane-pad the segment dim
    nc_pad = max(128, _round_up(num_classes, 128))  # lane-pad the logits dim
    h2_dim = int(params["w2"].shape[1])

    # ---- tiling of the N stream ----
    if tile_n is None:
        tile_n = 8192 if feat.dtype.itemsize <= 2 else 4096
    tile_n = max(8, min(_round_up(int(tile_n), 8), _round_up(n_total, 8)))
    num_tiles = pl.cdiv(n_total, tile_n)

    # Leading "parallel" axis: each v7x TensorCore streams its share of N and emits
    # a partial segment-sum. Harmless (sequential) on single-TC v5e/v6e.
    n_splits = max(1, min(int(n_splits), num_tiles))
    tiles_per_split = pl.cdiv(num_tiles, n_splits)
    overshoot = tiles_per_split * n_splits != num_tiles     # uneven split -> duplicate tiles
    ragged = overshoot or (n_total % tile_n != 0)           # any tile needs row masking?

    # ---- segment bookkeeping (host side) ----
    offset_i32 = offset.astype(jnp.int32)
    indptr = jnp.concatenate([jnp.zeros((1,), jnp.int32), offset_i32])
    starts = jnp.zeros((b_pad,), jnp.int32).at[:batch].set(indptr[:-1])
    ends = jnp.zeros((b_pad,), jnp.int32).at[:batch].set(indptr[1:])
    cnt = (ends - starts).astype(jnp.float32)
    # Empty / padded segments have an all-zero mask row -> pooled row stays 0
    # (documented divergence from torch segment_csr, which would give NaN).
    inv_cnt = (1.0 / jnp.maximum(cnt, 1.0)).reshape(b_pad, 1)
    starts = starts.reshape(b_pad, 1)
    ends = ends.reshape(b_pad, 1)

    # ================= kernel 1: streamed segment-sum (HBM-bound) =================
    def pool_kernel(feat_ref, starts_ref, ends_ref, partial_ref):
        s = pl.program_id(0)
        j = pl.program_id(1)
        t = s * tiles_per_split + j          # global feat-tile index (may overshoot)

        @pl.when(j == 0)
        def _init():                          # per-split / per-core accumulator init
            partial_ref[...] = jnp.zeros_like(partial_ref)

        def accumulate(zero_oob_rows):
            x = feat_ref[...]                                   # (tile_n, d) native dtype
            if zero_oob_rows:
                # Zero rows >= N: OOB padding of the last partial tile (and of clamped
                # duplicate tiles) is undefined, and 0 * NaN would poison the accumulator.
                row = jax.lax.broadcasted_iota(jnp.int32, (tile_n, 1), 0) + t * tile_n
                x = jnp.where(row < n_total, x, jnp.zeros_like(x))
            x = x.astype(compute_dtype)        # in-kernel cast (VPU work, hidden under DMA)
            # segment_csr(sum) as a one-hot mask matmul on the MXU.
            col = jax.lax.broadcasted_iota(jnp.int32, (b_pad, tile_n), 1) + t * tile_n
            mask = ((col >= starts_ref[...]) & (col < ends_ref[...])).astype(compute_dtype)
            partial_ref[...] += jnp.dot(mask, x, preferred_element_type=jnp.float32)

        if ragged:
            # Only the genuinely partial / duplicated tail tiles pay for the row mask.
            is_tail = (t + 1) * tile_n > n_total
            pl.when(jnp.logical_not(is_tail))(lambda: accumulate(False))
            pl.when(is_tail)(lambda: accumulate(True))
        else:
            accumulate(False)

    if overshoot:
        # Clamp the DMA of duplicated trailing tiles to a valid block; their
        # contribution is fully masked out in the kernel (rows >= N).
        feat_map = lambda s, j: (jnp.minimum(s * tiles_per_split + j, num_tiles - 1), 0)
    else:
        feat_map = lambda s, j: (s * tiles_per_split + j, 0)
    const2 = lambda s, j: (0, 0)   # resident operands: same block every step (no re-DMA)

    pool_cost = pl.CostEstimate(
        flops=2 * b_pad * n_splits * tiles_per_split * tile_n * d,
        transcendentals=0,
        bytes_accessed=(n_total * d * int(feat.dtype.itemsize)   # native-dtype feat stream
                        + n_splits * b_pad * d * 4               # partial sums
                        + 2 * b_pad * 4),                        # starts / ends
    )

    partials = pl.pallas_call(
        pool_kernel,
        out_shape=jax.ShapeDtypeStruct((n_splits, b_pad, d), jnp.float32),
        grid_spec=pltpu.PrefetchScalarGridSpec(
            num_scalar_prefetch=0,
            grid=(n_splits, tiles_per_split),
            in_specs=[
                pl.BlockSpec((tile_n, d), feat_map),   # feat tile, pipelined over N
                pl.BlockSpec((b_pad, 1), const2),      # starts (resident)
                pl.BlockSpec((b_pad, 1), const2),      # ends   (resident)
            ],
            out_specs=pl.BlockSpec((None, b_pad, d), lambda s, j: (s, 0, 0)),
        ),
        compiler_params=pltpu.CompilerParams(
            dimension_semantics=("parallel", "arbitrary"),  # split across TCs, reduce over N
            vmem_limit_bytes=32 * 1024 * 1024,              # fits v5e/v6e/v7x scoped VMEM
        ),
        cost_estimate=pool_cost,
    )(feat, starts, ends)

    # ================= kernel 2: tiny epilogue (reduce splits + MLP head) =================
    def fold_bn(bias, gamma, beta, rmean, rvar):
        scale = gamma / jnp.sqrt(rvar + BN_EPS)
        shift = (bias - rmean) * scale + beta
        return scale[None, :].astype(jnp.float32), shift[None, :].astype(jnp.float32)

    s1, t1 = fold_bn(params["b1"], params["g1"], params["be1"], params["rm1"], params["rv1"])
    s2, t2 = fold_bn(params["b2"], params["g2"], params["be2"], params["rm2"], params["rv2"])

    # lane-pad the final layer to 128 classes
    w3p = jnp.zeros((h2_dim, nc_pad), jnp.float32).at[:, :num_classes].set(params["w3"])
    b3p = jnp.zeros((1, nc_pad), jnp.float32).at[0, :num_classes].set(params["b3"])

    def head_kernel(part_ref, invcnt_ref, w1_ref, s1_ref, t1_ref,
                    w2_ref, s2_ref, t2_ref, w3_ref, b3_ref, out_ref):
        pooled = jnp.sum(part_ref[...], axis=0) * invcnt_ref[...]          # (b_pad, d) f32
        # Linear+BN(eval)+ReLU -> Dropout(identity) -> Linear+BN(eval)+ReLU
        # -> Dropout(identity) -> Linear
        h1 = jnp.dot(pooled, w1_ref[...], preferred_element_type=jnp.float32)
        h1 = jnp.maximum(h1 * s1_ref[...] + t1_ref[...], 0.0)
        h2 = jnp.dot(h1, w2_ref[...], preferred_element_type=jnp.float32)
        h2 = jnp.maximum(h2 * s2_ref[...] + t2_ref[...], 0.0)
        out_ref[...] = jnp.dot(h2, w3_ref[...], preferred_element_type=jnp.float32) + b3_ref[...]

    # All operands are tiny (<1 MiB total): no grid, whole arrays land in VMEM.
    out_padded = pl.pallas_call(
        head_kernel,
        out_shape=jax.ShapeDtypeStruct((b_pad, nc_pad), jnp.float32),
    )(partials, inv_cnt,
      params["w1"].astype(jnp.float32), s1, t1,
      params["w2"].astype(jnp.float32), s2, t2,
      w3p, b3p)

    return {"cls_logits": out_padded[:batch, :num_classes]}


def _reference_forward(feat, offset, params, num_classes, compute_dtype=jnp.bfloat16):
    """Plain numpy reference. The kernel casts feat to `compute_dtype` in-kernel before
    the mask matmul, so the reference uses identically quantized features to isolate
    kernel correctness."""
    f = np.asarray(jnp.asarray(feat).astype(compute_dtype).astype(jnp.float32))
    indptr = np.concatenate([[0], np.asarray(offset)])
    pooled = np.stack([f[indptr[b]:indptr[b + 1]].mean(axis=0) for b in range(len(offset))])

    def bn(x, g, be, rm, rv):
        return (x - np.asarray(rm)) / np.sqrt(np.asarray(rv) + BN_EPS) * np.asarray(g) + np.asarray(be)

    h1 = np.maximum(bn(pooled @ np.asarray(params["w1"]) + np.asarray(params["b1"]),
                       params["g1"], params["be1"], params["rm1"], params["rv1"]), 0.0)
    h2 = np.maximum(bn(h1 @ np.asarray(params["w2"]) + np.asarray(params["b2"]),
                       params["g2"], params["be2"], params["rm2"], params["rv2"]), 0.0)
    return h2 @ np.asarray(params["w3"]) + np.asarray(params["b3"])


if __name__ == "__main__":
    num_classes = 40
    embed_dim = 256
    batch = 2
    # points per batch element: 10 and 11 -> cumulative offsets [10, 21]
    offset = jnp.array([10, 21], dtype=jnp.int32)
    n_total = int(offset[-1])

    key = jax.random.PRNGKey(0)
    keys = jax.random.split(key, 12)

    feat = jax.random.normal(keys[0], (n_total, embed_dim), dtype=jnp.float32)

    params = {
        # Linear(256 -> 256)
        "w1": 0.05 * jax.random.normal(keys[1], (embed_dim, 256), jnp.float32),
        "b1": 0.05 * jax.random.normal(keys[2], (256,), jnp.float32),
        # BatchNorm1d(256) running stats + affine
        "g1": 1.0 + 0.1 * jax.random.normal(keys[3], (256,), jnp.float32),
        "be1": 0.1 * jax.random.normal(keys[4], (256,), jnp.float32),
        "rm1": 0.05 * jax.random.normal(keys[5], (256,), jnp.float32),
        "rv1": 1.0 + 0.1 * jax.nn.softplus(jax.random.normal(keys[5], (256,), jnp.float32)),
        # Linear(256 -> 128)
        "w2": 0.05 * jax.random.normal(keys[6], (256, 128), jnp.float32),
        "b2": 0.05 * jax.random.normal(keys[7], (128,), jnp.float32),
        # BatchNorm1d(128)
        "g2": 1.0 + 0.1 * jax.random.normal(keys[8], (128,), jnp.float32),
        "be2": 0.1 * jax.random.normal(keys[9], (128,), jnp.float32),
        "rm2": 0.05 * jax.random.normal(keys[10], (128,), jnp.float32),
        "rv2": 1.0 + 0.1 * jax.nn.softplus(jax.random.normal(keys[10], (128,), jnp.float32)),
        # Linear(128 -> num_classes)
        "w3": 0.05 * jax.random.normal(keys[11], (128, num_classes), jnp.float32),
        "b3": 0.05 * jax.random.normal(keys[2], (num_classes,), jnp.float32),
    }

    # Toy sizes: tile_n=8 + n_splits=2 exercise the multi-step accumulator, the masked
    # partial last tile, AND the clamped duplicate tile of the uneven 2-way split
    # (production defaults: tile_n ~ 4096-8192, n_splits=2).
    out = default_classifier_forward(feat, offset, params, num_classes, tile_n=8, n_splits=2)
    logits = jax.block_until_ready(out["cls_logits"])

    ref = _reference_forward(feat, offset, params, num_classes)
    assert logits.shape == (batch, num_classes)
    # Tolerance covers the bf16 feature quantization (reference uses identically
    # quantized features) plus MXU matmul-pass rounding in the tiny f32 MLP epilogue.
    np.testing.assert_allclose(np.asarray(logits), ref, rtol=3e-3, atol=3e-3)

    print("KERNEL_OK")
</pallas_src>

<mosaic_0001>
module attributes {stable_mosaic.version = 11 : i64} {
  func.func @pool_kernel(%arg0: i32, %arg1: i32, %arg2: memref<8x256xf32, #tpu.memory_space<vmem>>, %arg3: memref<8x1xi32, #tpu.memory_space<vmem>>, %arg4: memref<8x1xi32, #tpu.memory_space<vmem>>, %arg5: memref<1x8x256xf32, #tpu.memory_space<vmem>>) attributes {dimension_semantics = [#tpu.dimension_semantics<parallel>, #tpu.dimension_semantics<arbitrary>], iteration_bounds = array<i64: 2, 2>, scalar_prefetch = 0 : i64, scratch_operands = 0 : i64, tpu.core_type = #tpu.core_type<tc>, window_params = [{transform_indices = @transform_0, window_bounds = array<i64: 8, 256>}, {pipeline_mode = #tpu.pipeline_mode<synchronous>, transform_indices = @transform_1, window_bounds = array<i64: 8, 1>}, {pipeline_mode = #tpu.pipeline_mode<synchronous>, transform_indices = @transform_2, window_bounds = array<i64: 8, 1>}, {transform_indices = @transform_3, window_bounds = array<i64: 1, 8, 256>}]} {
    %c2_i32 = arith.constant 2 : i32
    %0 = arith.muli %arg0, %c2_i32 : i32
    %1 = arith.addi %0, %arg1 : i32
    %c0_i32 = arith.constant 0 : i32
    %2 = arith.cmpi eq, %arg1, %c0_i32 : i32
    %3 = arith.extui %2 : i1 to i32
    %c0_i32_0 = arith.constant 0 : i32
    %4 = arith.cmpi ne, %3, %c0_i32_0 : i32
    scf.if %4 {
      %cst = arith.constant 0.000000e+00 : f32
      %13 = vector.broadcast %cst : f32 to vector<8x256xf32>
      %c0 = arith.constant 0 : index
      %c0_3 = arith.constant 0 : index
      %c0_4 = arith.constant 0 : index
      %14 = vector.load %arg5[%c0, %c0_3, %c0_4] : memref<1x8x256xf32, #tpu.memory_space<vmem>>, vector<1x8x256xf32>
      %15 = vector.shape_cast %14 : vector<1x8x256xf32> to vector<8x256xf32>
      %16 = vector.shape_cast %13 : vector<8x256xf32> to vector<1x8x256xf32>
      tpu.vector_store %arg5[%c0, %c0_3, %c0_4], %16 {strides = array<i32>} : memref<1x8x256xf32, #tpu.memory_space<vmem>>, vector<1x8x256xf32>,
    } else {
    }
    %c1_i32 = arith.constant 1 : i32
    %5 = arith.addi %1, %c1_i32 : i32
    %c8_i32 = arith.constant 8 : i32
    %6 = arith.muli %5, %c8_i32 : i32
    %c21_i32 = arith.constant 21 : i32
    %7 = arith.cmpi sgt, %6, %c21_i32 : i32
    %true = arith.constant true
    %8 = arith.xori %7, %true : i1
    %9 = arith.extui %8 : i1 to i32
    %c0_i32_1 = arith.constant 0 : i32
    %10 = arith.cmpi ne, %9, %c0_i32_1 : i32
    scf.if %10 {
      %c0 = arith.constant 0 : index
      %c0_3 = arith.constant 0 : index
      %13 = vector.load %arg2[%c0, %c0_3] : memref<8x256xf32, #tpu.memory_space<vmem>>, vector<8x256xf32>
      %14 = arith.truncf %13 : vector<8x256xf32> to vector<8x256xbf16>
      %15 = tpu.iota {dimensions = array<i32: 1>} : vector<8x8xi32>
      %c8_i32_4 = arith.constant 8 : i32
      %16 = arith.muli %1, %c8_i32_4 : i32
      %17 = vector.broadcast %16 : i32 to vector<8x8xi32>
      %18 = arith.addi %15, %17 : vector<8x8xi32>
      %c0_5 = arith.constant 0 : index
      %c0_6 = arith.constant 0 : index
      %19 = vector.load %arg3[%c0_5, %c0_6] : memref<8x1xi32, #tpu.memory_space<vmem>>, vector<8x1xi32>
      %20 = vector.broadcast %19 : vector<8x1xi32> to vector<8x8xi32>
      %21 = arith.cmpi sge, %18, %20 : vector<8x8xi32>
      %c0_7 = arith.constant 0 : index
      %c0_8 = arith.constant 0 : index
      %22 = vector.load %arg4[%c0_7, %c0_8] : memref<8x1xi32, #tpu.memory_space<vmem>>, vector<8x1xi32>
      %23 = vector.broadcast %22 : vector<8x1xi32> to vector<8x8xi32>
      %24 = arith.cmpi slt, %18, %23 : vector<8x8xi32>
      %25 = arith.andi %21, %24 : vector<8x8xi1>
      %26 = arith.extui %25 : vector<8x8xi1> to vector<8x8xi32>
      %27 = arith.sitofp %26 : vector<8x8xi32> to vector<8x8xf32>
      %28 = arith.truncf %27 : vector<8x8xf32> to vector<8x8xbf16>
      %c0_9 = arith.constant 0 : index
      %c0_10 = arith.constant 0 : index
      %c0_11 = arith.constant 0 : index
      %29 = vector.load %arg5[%c0_9, %c0_10, %c0_11] : memref<1x8x256xf32, #tpu.memory_space<vmem>>, vector<1x8x256xf32>
      %30 = vector.shape_cast %29 : vector<1x8x256xf32> to vector<8x256xf32>
      %cst = arith.constant dense<0.000000e+00> : vector<8x256xf32>
      %31 = tpu.matmul %28, %14, %cst {dimension_numbers = #tpu.dot_dimension_numbers<[1], [0], [0], [1], [0, 0, 1, 1], [], []>} : vector<8x8xbf16>, vector<8x256xbf16>, vector<8x256xf32> -> vector<8x256xf32>
      %32 = arith.addf %30, %31 : vector<8x256xf32>
      %c0_12 = arith.constant 0 : index
      %c0_13 = arith.constant 0 : index
      %c0_14 = arith.constant 0 : index
      %33 = vector.load %arg5[%c0_12, %c0_13, %c0_14] : memref<1x8x256xf32, #tpu.memory_space<vmem>>, vector<1x8x256xf32>
      %34 = vector.shape_cast %33 : vector<1x8x256xf32> to vector<8x256xf32>
      %35 = vector.shape_cast %32 : vector<8x256xf32> to vector<1x8x256xf32>
      tpu.vector_store %arg5[%c0_12, %c0_13, %c0_14], %35 {strides = array<i32>} : memref<1x8x256xf32, #tpu.memory_space<vmem>>, vector<1x8x256xf32>,
    } else {
    }
    %11 = arith.extui %7 : i1 to i32
    %c0_i32_2 = arith.constant 0 : i32
    %12 = arith.cmpi ne, %11, %c0_i32_2 : i32
    scf.if %12 {
      %c0 = arith.constant 0 : index
      %c0_3 = arith.constant 0 : index
      %13 = vector.load %arg2[%c0, %c0_3] : memref<8x256xf32, #tpu.memory_space<vmem>>, vector<8x256xf32>
      %14 = tpu.iota {dimensions = array<i32: 0>} : vector<8x1xi32>
      %c8_i32_4 = arith.constant 8 : i32
      %15 = arith.muli %1, %c8_i32_4 : i32
      %16 = vector.broadcast %15 : i32 to vector<8x1xi32>
      %17 = arith.addi %14, %16 : vector<8x1xi32>
      %c21_i32_5 = arith.constant 21 : i32
      %18 = vector.broadcast %c21_i32_5 : i32 to vector<8x1xi32>
      %19 = arith.cmpi slt, %17, %18 : vector<8x1xi32>
      %cst = arith.constant 0.000000e+00 : f32
      %20 = vector.broadcast %cst : f32 to vector<8x256xf32>
      %21 = vector.shape_cast %19 : vector<8x1xi1> to vector<8x1xi1>
      %22 = vector.broadcast %21 : vector<8x1xi1> to vector<8x256xi1>
      %23 = arith.select %22, %13, %20 : vector<8x256xi1>, vector<8x256xf32>
      %24 = arith.truncf %23 : vector<8x256xf32> to vector<8x256xbf16>
      %25 = tpu.iota {dimensions = array<i32: 1>} : vector<8x8xi32>
      %c8_i32_6 = arith.constant 8 : i32
      %26 = arith.muli %1, %c8_i32_6 : i32
      %27 = vector.broadcast %26 : i32 to vector<8x8xi32>
      %28 = arith.addi %25, %27 : vector<8x8xi32>
      %c0_7 = arith.constant 0 : index
      %c0_8 = arith.constant 0 : index
      %29 = vector.load %arg3[%c0_7, %c0_8] : memref<8x1xi32, #tpu.memory_space<vmem>>, vector<8x1xi32>
      %30 = vector.broadcast %29 : vector<8x1xi32> to vector<8x8xi32>
      %31 = arith.cmpi sge, %28, %30 : vector<8x8xi32>
      %c0_9 = arith.constant 0 : index
      %c0_10 = arith.constant 0 : index
      %32 = vector.load %arg4[%c0_9, %c0_10] : memref<8x1xi32, #tpu.memory_space<vmem>>, vector<8x1xi32>
      %33 = vector.broadcast %32 : vector<8x1xi32> to vector<8x8xi32>
      %34 = arith.cmpi slt, %28, %33 : vector<8x8xi32>
      %35 = arith.andi %31, %34 : vector<8x8xi1>
      %36 = arith.extui %35 : vector<8x8xi1> to vector<8x8xi32>
      %37 = arith.sitofp %36 : vector<8x8xi32> to vector<8x8xf32>
      %38 = arith.truncf %37 : vector<8x8xf32> to vector<8x8xbf16>
      %c0_11 = arith.constant 0 : index
      %c0_12 = arith.constant 0 : index
      %c0_13 = arith.constant 0 : index
      %39 = vector.load %arg5[%c0_11, %c0_12, %c0_13] : memref<1x8x256xf32, #tpu.memory_space<vmem>>, vector<1x8x256xf32>
      %40 = vector.shape_cast %39 : vector<1x8x256xf32> to vector<8x256xf32>
      %cst_14 = arith.constant dense<0.000000e+00> : vector<8x256xf32>
      %41 = tpu.matmul %38, %24, %cst_14 {dimension_numbers = #tpu.dot_dimension_numbers<[1], [0], [0], [1], [0, 0, 1, 1], [], []>} : vector<8x8xbf16>, vector<8x256xbf16>, vector<8x256xf32> -> vector<8x256xf32>
      %42 = arith.addf %40, %41 : vector<8x256xf32>
      %c0_15 = arith.constant 0 : index
      %c0_16 = arith.constant 0 : index
      %c0_17 = arith.constant 0 : index
      %43 = vector.load %arg5[%c0_15, %c0_16, %c0_17] : memref<1x8x256xf32, #tpu.memory_space<vmem>>, vector<1x8x256xf32>
      %44 = vector.shape_cast %43 : vector<1x8x256xf32> to vector<8x256xf32>
      %45 = vector.shape_cast %42 : vector<8x256xf32> to vector<1x8x256xf32>
      tpu.vector_store %arg5[%c0_15, %c0_16, %c0_17], %45 {strides = array<i32>} : memref<1x8x256xf32, #tpu.memory_space<vmem>>, vector<1x8x256xf32>,
    } else {
    }
    return
  }
  func.func @transform_0(%arg0: i32, %arg1: i32) -> (i32, i32) {
    %c2_i32 = arith.constant 2 : i32
    %0 = arith.muli %arg0, %c2_i32 : i32
    %1 = arith.addi %0, %arg1 : i32
    %c2_i32_0 = arith.constant 2 : i32
    %2 = arith.minsi %1, %c2_i32_0 : i32
    %c0_i32 = arith.constant 0 : i32
    %c0_i32_1 = arith.constant 0 : i32
    return %2, %c0_i32 : i32, i32
  }
  func.func @transform_1(%arg0: i32, %arg1: i32) -> (i32, i32) {
    %c0_i32 = arith.constant 0 : i32
    %c0_i32_0 = arith.constant 0 : i32
    %c0_i32_1 = arith.constant 0 : i32
    return %c0_i32, %c0_i32_0 : i32, i32
  }
  func.func @transform_2(%arg0: i32, %arg1: i32) -> (i32, i32) {
    %c0_i32 = arith.constant 0 : i32
    %c0_i32_0 = arith.constant 0 : i32
    %c0_i32_1 = arith.constant 0 : i32
    return %c0_i32, %c0_i32_0 : i32, i32
  }
  func.func @transform_3(%arg0: i32, %arg1: i32) -> (i32, i32, i32) {
    %c0_i32 = arith.constant 0 : i32
    %c0_i32_0 = arith.constant 0 : i32
    %c0_i32_1 = arith.constant 0 : i32
    return %arg0, %c0_i32, %c0_i32_0 : i32, i32, i32
  }
}

</mosaic_0001>

<llo_original>
// kernel: tpu_custom_call.1
$region0: #{tpu_custom_call.1}
  #allocation0 [shape = 'u32[]', space=smem, size = 0x4, offset = 0x4, fixed_abs, tag = 'smem constant byte address 0x4 - core index']
  #allocation1 [shape = 'u32[72,128]{1,0:T(1,128)}', space=vmem, size = 0x9000, scoped, tag = 'internal scratch']
  %s0 = inlined_call_operand.hbm [shape: f32[21,256], index: 0, kind: input, shape index: {}]
  %s1 = inlined_call_operand.vmem [shape: s32[8,1], index: 1, kind: input, shape index: {}]
  %s2 = inlined_call_operand.vmem [shape: s32[8,1], index: 2, kind: input, shape index: {}]
  %s3 = inlined_call_operand.hbm [shape: f32[2,8,256], index: 3, kind: output, shape index: {}]
  %s4 = sld [smem:[#allocation0]]
  $region61: #{tpu_custom_call.1} parent=0
    _
  %s6 = ssub.s32 1, %s4
  %s7 = scalar_select 0, %s6, %s4
  $region1: #{tpu_custom_call.1} parent=0
    #allocation2 [shape = 'u8[16384]{0}', space=vmem, size = 0x4000, scoped, tag = 'input window, operand 0']
    #allocation3 [shape = 's32[2]{0}', space=sflag, size = 0x8, scoped, tag = 'scoped memory for tpu_custom_call.1']
    #allocation4 [shape = 's32[2]{0}', space=sflag, size = 0x8, scoped, tag = 'scoped memory for tpu_custom_call.1']
    #allocation5 [shape = 'u8[16384]{0}', space=vmem, size = 0x4000, scoped, tag = 'output window, operand 0']
    %8 = vsyncpa [#allocation3], 0
    %s9 = scalar_lea.sflag [#allocation3], 1
    %10 = vsyncpa %s9, 0
    %11 = vsyncpa [#allocation4], 0
    %s12 = scalar_lea.sflag [#allocation4], 1
    %13 = vsyncpa %s12, 0
    loop: start=0, step=1, limit=6
    $region2: #{tpu_custom_call.1} parent=1 // loop_pre_header
      _
    $region3: #{tpu_custom_call.1} parent=1 // loop_header
      %s15 = sphi 0, %s19
      %p16 = scmp.ge.s32.totalorder %s15, 6
      %s22 = sphi 0, %s34
      %s23 = sphi 0, %s30
      %s24 = sphi 0, %s22
      %s25 = sphi 0, %s23
      %s26 = sphi 0, %s24
      %s27 = sphi 0, %s25
      %s45 = sphi 0, %s47
      %s48 = sphi 0, %s45
      %s49 = sphi 0, %s48
      %s65 = sphi 0, %s49
      %s69 = sphi 0, %s69
      %s71 = sphi 0, %s69
      %s72 = sphi 0, %s71
      %s86 = sphi 0, %s72
      %s90 = sphi 0, %s90
      %s92 = sphi 0, %s90
      %s93 = sphi 0, %s92
      %s107 = sphi 0, %s93
      %s113 = sphi 0, %s115
      %s116 = sphi 0, %s113
      %s117 = sphi 0, %s116
      %s133 = sphi 0, %s117
    $region4: #{tpu_custom_call.1} parent=1 // loop_header_branch
      %18 = sbr.rel (%p16) target = $region8
    $region5: #{tpu_custom_call.1} parent=1 // loop_body
      %s20 = ssub.s32 %s15, 1
      %s21 = ssub.s32 %s15, 2
      %s28 = sadd.s32 1, %s23
      %p29 = scmp.ge.s32.totalorder %s28, 2
      %s30 = scalar_select %p29, 0, %s28
      %s31 = sadd.s32 1, %s22
      %s32 = scalar_select %p29, %s31, %s22
      %p33 = scmp.ge.s32.totalorder %s32, 2
      %s34 = scalar_select %p33, 0, %s32
      %s35 = smul.u32 %s22, 2
      %s36 = sadd.s32 %s35, %s23
      %p37 = scmp.lt.s32.totalorder %s36, 2
      %s38 = scalar_select %p37, %s36, 2
      %s39 = smul.u32 %s34, 2
      %s40 = sadd.s32 %s39, %s30
      %p41 = scmp.lt.s32.totalorder %s40, 2
      %s42 = scalar_select %p41, %s40, 2
      %s43 = ssub.s32 %s38, %s42
      %p44 = scmp.eq.s32.totalorder %s43, 0
      %s46 = sadd.s32 %s45, 1
      %s47 = scalar_select %p44, %s45, %s46
      %p50 = pneg %p44
      %p51 = scmp.eq.s32.totalorder %s15, 3
      %p52 = por %p50, %p51
      %p53 = scmp.ne.s32.totalorder %s45, %s48
      %p54 = scmp.eq.s32.totalorder %s15, 0
      %p55 = por %p53, %p54
      %p56 = scmp.ne.s32.totalorder %s45, %s48
      %p57 = scmp.eq.s32.totalorder %s20, 3
      %p58 = por %p56, %p57
      %p59 = scmp.ne.s32.totalorder %s48, %s49
      %p60 = scmp.eq.s32.totalorder %s20, 0
      %p61 = por %p59, %p60
      %p62 = scmp.ne.s32.totalorder %s48, %s49
      %p63 = scmp.eq.s32.totalorder %s21, 3
      %p64 = por %p62, %p63
      %p66 = scmp.ne.s32.totalorder %s49, %s65
      %p67 = scmp.eq.s32.totalorder %s21, 0
      %p68 = por %p66, %p67
      %s70 = sadd.s32 %s69, 1
      %p73 = scmp.eq.s32.totalorder %s15, 3
      %p74 = scmp.ne.s32.totalorder %s69, %s71
      %p75 = scmp.eq.s32.totalorder %s15, 0
      %p76 = por %p74, %p75
      %p77 = scmp.ne.s32.totalorder %s69, %s71
      %p78 = scmp.eq.s32.totalorder %s20, 3
      %p79 = por %p77, %p78
      %p80 = scmp.ne.s32.totalorder %s71, %s72
      %p81 = scmp.eq.s32.totalorder %s20, 0
      %p82 = por %p80, %p81
      %p83 = scmp.ne.s32.totalorder %s71, %s72
      %p84 = scmp.eq.s32.totalorder %s21, 3
      %p85 = por %p83, %p84
      %p87 = scmp.ne.s32.totalorder %s72, %s86
      %p88 = scmp.eq.s32.totalorder %s21, 0
      %p89 = por %p87, %p88
      %s91 = sadd.s32 %s90, 1
      %p94 = scmp.eq.s32.totalorder %s15, 3
      %p95 = scmp.ne.s32.totalorder %s90, %s92
      %p96 = scmp.eq.s32.totalorder %s15, 0
      %p97 = por %p95, %p96
      %p98 = scmp.ne.s32.totalorder %s90, %s92
      %p99 = scmp.eq.s32.totalorder %s20, 3
      %p100 = por %p98, %p99
      %p101 = scmp.ne.s32.totalorder %s92, %s93
      %p102 = scmp.eq.s32.totalorder %s20, 0
      %p103 = por %p101, %p102
      %p104 = scmp.ne.s32.totalorder %s92, %s93
      %p105 = scmp.eq.s32.totalorder %s21, 3
      %p106 = por %p104, %p105
      %p108 = scmp.ne.s32.totalorder %s93, %s107
      %p109 = scmp.eq.s32.totalorder %s21, 0
      %p110 = por %p108, %p109
      %s111 = ssub.s32 %s22, %s34
      %p112 = scmp.eq.s32.totalorder %s111, 0
      %s114 = sadd.s32 %s113, 1
      %s115 = scalar_select %p112, %s113, %s114
      %p118 = pneg %p112
      %p119 = scmp.eq.s32.totalorder %s15, 3
      %p120 = por %p118, %p119
      %p121 = scmp.ne.s32.totalorder %s113, %s116
      %p122 = scmp.eq.s32.totalorder %s15, 0
      %p123 = por %p121, %p122
      %p124 = scmp.ne.s32.totalorder %s113, %s116
      %p125 = scmp.eq.s32.totalorder %s20, 3
      %p126 = por %p124, %p125
      %p127 = scmp.ne.s32.totalorder %s116, %s117
      %p128 = scmp.eq.s32.totalorder %s20, 0
      %p129 = por %p127, %p128
      %p130 = scmp.ne.s32.totalorder %s116, %s117
      %p131 = scmp.eq.s32.totalorder %s21, 3
      %p132 = por %p130, %p131
      %p134 = scmp.ne.s32.totalorder %s117, %s133
      %p135 = scmp.eq.s32.totalorder %s21, 0
      %p136 = por %p134, %p135
      %p137 = scmp.le.s32.totalorder 1, %s15
      %p138 = scmp.lt.s32.totalorder %s15, 5
      %p139 = pnand %p137, %p138
      %p140 = pneg %p139
      // Predicated region
      $region9: #{tpu_custom_call.1} parent=5 // pred_check
        _
      $region10: #{tpu_custom_call.1} parent=5 // pred_check_branch
        %142 = sbr.rel (%p139) target = $region12
      $region11: #{tpu_custom_call.1} parent=5 // pred_region
        %s143 = ssub.s32 %s15, 1
        // Predicated region
        $region13: #{tpu_custom_call.1} parent=11 // pred_check
          %p144 = pneg %p82
        $region14: #{tpu_custom_call.1} parent=11 // pred_check_branch
          %146 = sbr.rel (%p144) target = $region16
        $region15: #{tpu_custom_call.1} parent=11 // pred_region
          _
        $region16: #{tpu_custom_call.1} parent=11 // pred_fallthru
          _
        // Predicated region
        $region17: #{tpu_custom_call.1} parent=11 // pred_check
          %p147 = pneg %p103
        $region18: #{tpu_custom_call.1} parent=11 // pred_check_branch
          %149 = sbr.rel (%p147) target = $region20
        $region19: #{tpu_custom_call.1} parent=11 // pred_region
          _
        $region20: #{tpu_custom_call.1} parent=11 // pred_fallthru
          _
      $region12: #{tpu_custom_call.1} parent=5 // pred_fallthru
        _
      %p150 = scmp.lt.s32.totalorder %s15, 4
      // Predicated region
      $region21: #{tpu_custom_call.1} parent=5 // pred_check
        %p151 = pneg %p150
      $region22: #{tpu_custom_call.1} parent=5 // pred_check_branch
        %153 = sbr.rel (%p151) target = $region24
      $region23: #{tpu_custom_call.1} parent=5 // pred_region
        // Predicated region
        $region25: #{tpu_custom_call.1} parent=23 // pred_check
          %p154 = pneg %p55
        $region26: #{tpu_custom_call.1} parent=23 // pred_check_branch
          %156 = sbr.rel (%p154) target = $region28
        $region27: #{tpu_custom_call.1} parent=23 // pred_region
          %s157 = sand.u32 %s45, 1
          %s158 = scalar_lea.sflag [#allocation3], %s157
          %s159 = sand.u32 %s45, 1
          %s160 = smul.addr %s159, 16
          %s161 = scalar_lea.vmem [#allocation2], %s160
          %s162 = smul.u32 %s22, 2
          %s163 = sadd.s32 %s162, %s23
          %p164 = scmp.lt.s32.totalorder %s163, 2
          %s165 = scalar_select %p164, %s163, 2
          %167 = vsyncadd %s158, 0
          %s168 = smul.addr %s165, 2
          %s169 = smul.addr %s168, 8
          %s170 = scalar_lea.hbm %s0, %s169
          %s172 = sshll.u32 %s170, 4
          %s173 = int_to_ptr.hbm [resolvable:$true] %s172
          %s174 = sshll.u32 %s161, 4
          %s175 = int_to_ptr.vmem [resolvable:$true] %s174
          %177 = dma.hbm_to_vmem [thread:$0]  %s173, 256, %s175, %s158
        $region28: #{tpu_custom_call.1} parent=23 // pred_fallthru
          _
      $region24: #{tpu_custom_call.1} parent=5 // pred_fallthru
        _
      %p178 = scmp.le.s32.totalorder 1, %s15
      %p179 = scmp.lt.s32.totalorder %s15, 5
      %p180 = pnand %p178, %p179
      %p181 = pneg %p180
      // Predicated region
      $region29: #{tpu_custom_call.1} parent=5 // pred_check
        _
      $region30: #{tpu_custom_call.1} parent=5 // pred_check_branch
        %183 = sbr.rel (%p180) target = $region32
      $region31: #{tpu_custom_call.1} parent=5 // pred_region
        %s184 = ssub.s32 %s15, 1
        %s185 = sand.u32 %s48, 1
        %s186 = scalar_lea.sflag [#allocation3], %s185
        %s187 = sand.u32 %s48, 1
        %s188 = smul.addr %s187, 16
        %s189 = scalar_lea.vmem [#allocation2], %s188
        // Predicated region
        $region33: #{tpu_custom_call.1} parent=31 // pred_check
          %p190 = pneg %p61
        $region34: #{tpu_custom_call.1} parent=31 // pred_check_branch
          %192 = sbr.rel (%p190) target = $region36
        $region35: #{tpu_custom_call.1} parent=31 // pred_region
          %194 = dma.done %s186, 256
        $region36: #{tpu_custom_call.1} parent=31 // pred_fallthru
          _
        %s195 = sand.u32 %s48, 1
        %s196 = scalar_lea.sflag [#allocation3], %s195
        %s197 = sand.u32 %s48, 1
        %s198 = smul.addr %s197, 16
        %s199 = scalar_lea.vmem [#allocation2], %s198
        %p200 = pneg %p61
        %p201 = pneg %p58
        %p202 = pneg %p82
        %p203 = pneg %p79
        %p204 = pneg %p103
        %p205 = pneg %p100
        %p206 = pneg %p129
        %p207 = pneg %p126
        %s208 = sand.u32 %s116, 1
        %s209 = scalar_lea.sflag [#allocation4], %s208
        %s210 = sand.u32 %s116, 1
        %s211 = smul.addr %s210, 16
        %s212 = scalar_lea.vmem [#allocation5], %s211
        %s213 = smul.u32 %s24, 2
        %s214 = sadd.s32 %s213, %s25
        %p215 = scmp.lt.s32.totalorder %s214, 2
        %s216 = scalar_select %p215, %s214, 2
        %s218 = smul.u32 %s24, 2
        %s219 = sadd.s32 %s218, %s25
        %p220 = scmp.eq.s32.totalorder %s25, 0
        // Predicated region
        $region37: #{tpu_custom_call.1} parent=31 // pred_check
          %p221 = pneg %p220
        $region38: #{tpu_custom_call.1} parent=31 // pred_check_branch
          %223 = sbr.rel (%p221) target = $region40
        $region39: #{tpu_custom_call.1} parent=31 // pred_region
          %224 = vst [vmem:[%s212] sm:$0xff] 0.0
          %225 = vst [vmem:[%s212 + $0x8] sm:$0xff] 0.0
        $region40: #{tpu_custom_call.1} parent=31 // pred_fallthru
          _
        %s226 = sadd.s32 %s219, 1
        %s227 = smul.u32 %s226, 8
        %p228 = scmp.gt.s32.totalorder %s227, 21
        %p229 = scmp.le.s32.totalorder %s227, 21
        // Predicated region
        $region41: #{tpu_custom_call.1} parent=31 // pred_check
          %p230 = pneg %p229
        $region42: #{tpu_custom_call.1} parent=31 // pred_check_branch
          %232 = sbr.rel (%p230) target = $region44
        $region43: #{tpu_custom_call.1} parent=31 // pred_region
          %v233 = vld [vmem:[%s189] sm:$0xff]
          %v234 = vld [vmem:[%s189 + $0x8] sm:$0xff]
          %v235 = vpack.c.bf16 %v233, %v233
          %v236 = vpack.c.bf16 %v234, %v234
          %v237 = vlaneseq
          %v238 = vand.u32 %v237, 127
          %s239 = smul.u32 %s219, 8
          %v240 = vstv %s239
          %v241 = vadd.s32 %v238, %v240
          %v242 = vld [vmem:[%s1] sm:$0xff]
          %243 = vset.pattern.permute.xlu0 0
          %244 = vperm.xlu0 %243, %v242
          %v245 = vpop.permute.xlu0 %244
          %vm246 = vcmp.ge.s32.totalorder %v241, %v245
          %v247 = vld [vmem:[%s2] sm:$0xff]
          %248 = vset.pattern.permute.xlu0 0
          %249 = vperm.xlu0 %248, %v247
          %v250 = vpop.permute.xlu0 %249
          %vm251 = vcmp.lt.s32.totalorder %v241, %v250
          %vm252 = vmand %vm246, %vm251
          %v253 = vsel %vm252, 1, 0
          %v254 = vcvt.s32.f32 %v253
          %v255 = vpack.c.bf16 %v254, %v254
          %v256 = vld [vmem:[%s212] sm:$0xff]
          %v257 = vld [vmem:[%s212 + $0x8] sm:$0xff]
          %vm258 = vcmask 64512
          %v260 = vsel %vm258, %v255, 0
          %vm262 = vcmask 1043456
          %v264 = vsel %vm262, %v235, 0
          %v267 = vsel %vm262, %v236, 0
          %269 = vmatpush.bf16.msra.mxu0 0
          %270 = vmatpush.bf16.msra.mxu0 0
          %271 = vmatpush.bf16.msra.mxu0 0
          %272 = vmatpush.bf16.msra.mxu0 0
          %273 = vmatpush.bf16.msra.mxu0 0
          %274 = vmatpush.bf16.msra.mxu0 0
          %275 = vmatpush.bf16.msra.mxu0 0
          %276 = vmatpush.bf16.msra.mxu0 %v264
          %277 = vmatmul.bf16.gmra.mxu0 %v260
          %v278 = vpop.f32.mrf.mxu0
          %v279 = vadd.f32 0.0, %v278
          %v280 = vpop.f32.mrf.mxu0
          %281 = vdwg.mxu0
          %282 = vmatpush.bf16.msra.mxu0 0
          %283 = vmatpush.bf16.msra.mxu0 0
          %284 = vmatpush.bf16.msra.mxu0 0
          %285 = vmatpush.bf16.msra.mxu0 0
          %286 = vmatpush.bf16.msra.mxu0 0
          %287 = vmatpush.bf16.msra.mxu0 0
          %288 = vmatpush.bf16.msra.mxu0 0
          %289 = vmatpush.bf16.msra.mxu0 %v267
          %290 = vmatmul.bf16.gmra.mxu0 %v260
          %v291 = vpop.f32.mrf.mxu0
          %v292 = vadd.f32 0.0, %v291
          %v293 = vpop.f32.mrf.mxu0
          %294 = vdwg.mxu0
          %v295 = vadd.f32 %v256, %v279
          %v296 = vadd.f32 %v257, %v292
          %297 = vst [vmem:[%s212] sm:$0xff] %v295
          %298 = vst [vmem:[%s212 + $0x8] sm:$0xff] %v296
        $region44: #{tpu_custom_call.1} parent=31 // pred_fallthru
          _
        // Predicated region
        $region45: #{tpu_custom_call.1} parent=31 // pred_check
          %p299 = pneg %p228
        $region46: #{tpu_custom_call.1} parent=31 // pred_check_branch
          %301 = sbr.rel (%p299) target = $region48
        $region47: #{tpu_custom_call.1} parent=31 // pred_region
          %v302 = vld [vmem:[%s189] sm:$0xff]
          %v303 = vld [vmem:[%s189 + $0x8] sm:$0xff]
          %v304 = vlaneseq
          %v305 = vshrl.u32 %v304, 7
          %s306 = smul.u32 %s219, 8
          %v307 = vstv %s306
          %v308 = vadd.s32 %v305, %v307
          %vm309 = vcmp.lt.s32.totalorder %v308, 21
          %v310 = vsel %vm309, 1, 0
          %vm311 = vcmp.eq.s32.totalorder %v310, 1
          %v312 = vsel %vm311, %v302, 0.0
          %v313 = vsel %vm311, %v303, 0.0
          %v314 = vpack.c.bf16 %v312, %v312
          %v315 = vpack.c.bf16 %v313, %v313
          %v316 = vlaneseq
          %v317 = vand.u32 %v316, 127
          %v318 = vadd.s32 %v317, %v307
          %v319 = vld [vmem:[%s1] sm:$0xff]
          %320 = vset.pattern.permute.xlu0 0
          %321 = vperm.xlu0 %320, %v319
          %v322 = vpop.permute.xlu0 %321
          %vm323 = vcmp.ge.s32.totalorder %v318, %v322
          %v324 = vld [vmem:[%s2] sm:$0xff]
          %325 = vset.pattern.permute.xlu0 0
          %326 = vperm.xlu0 %325, %v324
          %v327 = vpop.permute.xlu0 %326
          %vm328 = vcmp.lt.s32.totalorder %v318, %v327
          %vm329 = vmand %vm323, %vm328
          %v330 = vsel %vm329, 1, 0
          %v331 = vcvt.s32.f32 %v330
          %v332 = vpack.c.bf16 %v331, %v331
          %v333 = vld [vmem:[%s212] sm:$0xff]
          %v334 = vld [vmem:[%s212 + $0x8] sm:$0xff]
          %vm335 = vcmask 64512
          %v337 = vsel %vm335, %v332, 0
          %vm339 = vcmask 1043456
          %v341 = vsel %vm339, %v314, 0
          %v344 = vsel %vm339, %v315, 0
          %346 = vmatpush.bf16.msra.mxu0 0
          %347 = vmatpush.bf16.msra.mxu0 0
          %348 = vmatpush.bf16.msra.mxu0 0
          %349 = vmatpush.bf16.msra.mxu0 0
          %350 = vmatpush.bf16.msra.mxu0 0
          %351 = vmatpush.bf16.msra.mxu0 0
          %352 = vmatpush.bf16.msra.mxu0 0
          %353 = vmatpush.bf16.msra.mxu0 %v341
          %354 = vmatmul.bf16.gmra.mxu0 %v337
          %v355 = vpop.f32.mrf.mxu0
          %v356 = vadd.f32 0.0, %v355
          %v357 = vpop.f32.mrf.mxu0
          %358 = vdwg.mxu0
          %359 = vmatpush.bf16.msra.mxu0 0
          %360 = vmatpush.bf16.msra.mxu0 0
          %361 = vmatpush.bf16.msra.mxu0 0
          %362 = vmatpush.bf16.msra.mxu0 0
          %363 = vmatpush.bf16.msra.mxu0 0
          %364 = vmatpush.bf16.msra.mxu0 0
          %365 = vmatpush.bf16.msra.mxu0 0
          %366 = vmatpush.bf16.msra.mxu0 %v344
          %367 = vmatmul.bf16.gmra.mxu0 %v337
          %v368 = vpop.f32.mrf.mxu0
          %v369 = vadd.f32 0.0, %v368
          %v370 = vpop.f32.mrf.mxu0
          %371 = vdwg.mxu0
          %v372 = vadd.f32 %v333, %v356
          %v373 = vadd.f32 %v334, %v369
          %374 = vst [vmem:[%s212] sm:$0xff] %v372
          %375 = vst [vmem:[%s212 + $0x8] sm:$0xff] %v373
        $region48: #{tpu_custom_call.1} parent=31 // pred_fallthru
          _
        %s376 = sand.u32 %s116, 1
        %s377 = scalar_lea.sflag [#allocation4], %s376
        %s378 = sand.u32 %s116, 1
        %s379 = smul.addr %s378, 16
        %s380 = scalar_lea.vmem [#allocation5], %s379
        // Predicated region
        $region49: #{tpu_custom_call.1} parent=31 // pred_check
          %p381 = pneg %p126
        $region50: #{tpu_custom_call.1} parent=31 // pred_check_branch
          %383 = sbr.rel (%p381) target = $region52
        $region51: #{tpu_custom_call.1} parent=31 // pred_region
          %385 = vsyncadd %s377, 0
          %s386 = smul.addr %s24, 2
          %s387 = smul.addr %s386, 8
          %s388 = scalar_lea.hbm %s3, %s387
          %s390 = sshll.u32 %s380, 4
          %s391 = int_to_ptr.vmem [resolvable:$true] %s390
          %s392 = sshll.u32 %s388, 4
          %s393 = int_to_ptr.hbm [resolvable:$true] %s392
          %395 = dma.vmem_to_hbm [thread:$0]  %s391, 256, %s393, %s377
        $region52: #{tpu_custom_call.1} parent=31 // pred_fallthru
          _
      $region32: #{tpu_custom_call.1} parent=5 // pred_fallthru
        _
      %p396 = scmp.le.s32.totalorder 2, %s15
      // Predicated region
      $region53: #{tpu_custom_call.1} parent=5 // pred_check
        %p397 = pneg %p396
      $region54: #{tpu_custom_call.1} parent=5 // pred_check_branch
        %399 = sbr.rel (%p397) target = $region56
      $region55: #{tpu_custom_call.1} parent=5 // pred_region
        %s400 = ssub.s32 %s15, 2
        // Predicated region
        $region57: #{tpu_custom_call.1} parent=55 // pred_check
          %p401 = pneg %p132
        $region58: #{tpu_custom_call.1} parent=55 // pred_check_branch
          %403 = sbr.rel (%p401) target = $region60
        $region59: #{tpu_custom_call.1} parent=55 // pred_region
          %s404 = sand.u32 %s117, 1
          %s405 = scalar_lea.sflag [#allocation4], %s404
          %s406 = sand.u32 %s117, 1
          %s407 = smul.addr %s406, 16
          %s408 = scalar_lea.vmem [#allocation5], %s407
          %410 = dma.done %s405, 256
        $region60: #{tpu_custom_call.1} parent=55 // pred_fallthru
          _
      $region56: #{tpu_custom_call.1} parent=5 // pred_fallthru
        _
    $region6: #{tpu_custom_call.1} parent=1 // loop_footer
      %s19 = sadd.s32 1, %s15
    $region7: #{tpu_custom_call.1} parent=1 // loop_footer_branch
      %14 = sbr.rel target = $region3
    $region8: #{tpu_custom_call.1} parent=1 // loop_exit
      _
    %411 = vsyncpa [#allocation3], 1
    %s412 = scalar_lea.sflag [#allocation3], 1
    %413 = vsyncpa %s412, 1
    %414 = vsyncpa [#allocation4], 1
    %s415 = scalar_lea.sflag [#allocation4], 1
    %416 = vsyncpa %s415, 1

</llo_original>
